<compile_context>
chip_gen: v6e
topology: v6e:2x2x1
jax: 0.10.0
libtpu: 0.0.40
codegen_flags: <defaults>
</compile_context>

<pallas_src>
import jax
import jax.numpy as jnp
from jax.experimental import pallas as pl
from jax.experimental.pallas import tpu as pltpu

LEAKY_SLOPE = 0.01  # PyTorch nn.LeakyReLU default negative_slope

_ROW_ALIGN = 128                       # MXU/lane-native row tile granularity
_MAX_TM = 512                          # ~85% of HBM roofline per measured data
_DEFAULT_SCOPED_VMEM = 32 * 2**20      # compiler default scoped VMEM
_VMEM_CAP_V7X = 52 * 2**20             # leave headroom below v7x's 64 MiB
_VMEM_CAP_OTHER = 100 * 2**20          # v5e/v6e have 128 MiB physical
_SINGLE_BUFFER_WEIGHT_BYTES = 4 * 2**20
_HEADROOM_BYTES = 2 * 2**20


# ---------------------------------------------------------------------------
# Kernel
# ---------------------------------------------------------------------------
def _feature_mlp_kernel(x_ref, w1_ref, b1_ref, w2_ref, b2_ref, o_ref):
    # x_ref : (tm, F)         w1_ref: (F, H) bf16   b1_ref: (1, H) f32
    # w2_ref: (H, E) bf16     b2_ref: (1, E) f32    o_ref : (tm, E)
    x = x_ref[...].astype(w1_ref.dtype)                      # no-op if x is bf16
    h = jnp.dot(x, w1_ref[...], preferred_element_type=jnp.float32) + b1_ref[...]
    # LeakyReLU in f32 as mul+max (slope < 1 => identical to the cmp/select form).
    h = jnp.maximum(h, LEAKY_SLOPE * h)
    y = jnp.dot(h.astype(w2_ref.dtype), w2_ref[...],
                preferred_element_type=jnp.float32) + b2_ref[...]
    o_ref[...] = y.astype(o_ref.dtype)


# ---------------------------------------------------------------------------
# One-time parameter prep (off the hot path)
# ---------------------------------------------------------------------------
def prepare_params(w1, b1, w2, b2, *, compute_dtype=jnp.bfloat16):
    """Cast weights to the MXU compute dtype and reshape biases to (1, D) once."""
    return (
        w1.astype(compute_dtype),
        b1.reshape(1, -1).astype(jnp.float32),
        w2.astype(compute_dtype),
        b2.reshape(1, -1).astype(jnp.float32),
    )


# ---------------------------------------------------------------------------
# Tile-size / VMEM-budget selection
# ---------------------------------------------------------------------------
def _round_up(x, m):
    return ((x + m - 1) // m) * m


def _vmem_capacity_bytes():
    try:
        return int(pltpu.get_tpu_info().vmem_capacity_bytes)
    except Exception:
        return 128 * 2**20  # conservative: v5e/v6e physical size


def _select_tile_and_vmem(n_rows, F, H, E, x_itemsize, out_itemsize, w_itemsize):
    phys = _vmem_capacity_bytes()
    cap = _VMEM_CAP_V7X if phys <= 64 * 2**20 else _VMEM_CAP_OTHER

    weight_bytes = (F * H + H * E) * w_itemsize + (H + E) * 4
    single_buffer_weights = weight_bytes > _SINGLE_BUFFER_WEIGHT_BYTES
    weight_buffers = 1 if single_buffer_weights else 2

    padded = _round_up(max(n_rows, 1), _ROW_ALIGN)
    tm = min(_MAX_TM, padded)
    # Keep >= 2 parallel grid steps when there is enough work, so v7x's two
    # TensorCores can both be used via dimension_semantics=("parallel",).
    if padded >= 2 * _ROW_ALIGN and pl.cdiv(n_rows, tm) < 2:
        tm = max(_ROW_ALIGN, (padded // 2) // _ROW_ALIGN * _ROW_ALIGN)

    def budget(t):
        tiles = 2 * t * (F * x_itemsize + E * out_itemsize)   # double-buffered x/out
        hidden = t * H * 4                                    # f32 intermediate
        return tiles + hidden + weight_buffers * weight_bytes + _HEADROOM_BYTES

    while tm > _ROW_ALIGN and budget(tm) > cap:
        tm -= _ROW_ALIGN

    needed = budget(tm)
    if needed > cap:
        # TODO(synk): add a K-tiled schedule (reduction over feature_dim /
        # hidden_dim with an f32 accumulator + pl.when init/finalize) for the
        # case where the resident weights alone exceed the per-generation cap.
        raise ValueError(
            f"feature MLP weights need {needed} B of VMEM which exceeds the "
            f"per-generation cap of {cap} B; a K-tiled schedule is required.")

    vmem_limit = None if needed <= _DEFAULT_SCOPED_VMEM else int(min(needed, cap))
    return tm, vmem_limit, single_buffer_weights


# ---------------------------------------------------------------------------
# Batched wrapper: one pallas_call for the whole object-feature slab
# ---------------------------------------------------------------------------
def feature_mlp_slab(x, prepared_params, *, out_dtype=None):
    """Fused Linear -> LeakyReLU -> Linear over a [N, F] slab of object features."""
    w1, b1, w2, b2 = prepared_params
    N, F = x.shape
    H = w1.shape[1]
    E = w2.shape[1]
    if out_dtype is None:
        out_dtype = x.dtype
    if N == 0:
        return jnp.zeros((0, E), out_dtype)

    tm, vmem_limit, single_buffer_weights = _select_tile_and_vmem(
        N, F, H, E,
        jnp.dtype(x.dtype).itemsize,
        jnp.dtype(out_dtype).itemsize,
        jnp.dtype(w1.dtype).itemsize,
    )

    # No input padding: Pallas masks the boundary block's reads/writes.
    grid = (pl.cdiv(N, tm),)

    def _row_spec(shape):
        return pl.BlockSpec(shape, lambda i: (i, 0))

    def _resident_spec(shape):
        # Grid-invariant weights/biases: single-buffer them once they are big
        # enough for the extra buffer to matter (VMEM pressure on v7x).
        if single_buffer_weights:
            return pl.BlockSpec(shape, lambda i: (0, 0),
                                pipeline_mode=pl.Buffered(1))
        return pl.BlockSpec(shape, lambda i: (0, 0))

    return pl.pallas_call(
        _feature_mlp_kernel,
        out_shape=jax.ShapeDtypeStruct((N, E), out_dtype),
        grid_spec=pl.GridSpec(
            grid=grid,
            in_specs=[
                _row_spec((tm, F)),        # object-feature tile
                _resident_spec((F, H)),    # w1 (resident)
                _resident_spec((1, H)),    # b1 (resident)
                _resident_spec((H, E)),    # w2 (resident)
                _resident_spec((1, E)),    # b2 (resident)
            ],
            out_specs=_row_spec((tm, E)),
        ),
        compiler_params=pltpu.CompilerParams(
            dimension_semantics=("parallel",),
            vmem_limit_bytes=vmem_limit,
        ),
    )(x, w1, b1, w2, b2)


# ---------------------------------------------------------------------------
# Mirror of VCML_Model.process_objects, contiguous-slab contract (no concat).
# ---------------------------------------------------------------------------
def process_objects_slab(object_features, counts, prepared_params, *, out_dtype=None):
    """Apply the feature MLP to all images' objects with ONE kernel call.

    object_features: [sum(N_i), F] contiguous slab emitted by the scene-graph
        stage (bf16 preferred so the HBM stream is half-width).
    counts[i]: number of objects of image i, or None if the scene graph
        produced no feature tensor for that image (-> None output, mirroring
        `feature is None` pass-through in the reference PyTorch code).
    """
    live_counts = [c for c in counts if c is not None]
    total = int(sum(live_counts))
    embed_dim = prepared_params[2].shape[1]
    if out_dtype is None:
        out_dtype = object_features.dtype

    if total > 0:
        slab = (object_features if total == object_features.shape[0]
                else object_features[:total])
        embeds = feature_mlp_slab(slab, prepared_params, out_dtype=out_dtype)
    else:
        embeds = jnp.zeros((0, embed_dim), out_dtype)

    out, offset = [], 0
    for c in counts:
        if c is None:
            out.append(None)
            continue
        out.append(embeds[offset:offset + c])   # lazy per-image view of the slab
        offset += c
    return out


# ---------------------------------------------------------------------------
# References
# ---------------------------------------------------------------------------
def feature_mlp_ref_matched(x, w1, b1, w2, b2):
    """Matched-precision reference (bf16 matmul inputs, f32 accumulation)."""
    xf = x.astype(jnp.bfloat16).astype(jnp.float32)
    w1f = w1.astype(jnp.bfloat16).astype(jnp.float32)
    w2f = w2.astype(jnp.bfloat16).astype(jnp.float32)
    h = xf @ w1f + b1.reshape(1, -1)
    h = jnp.maximum(h, LEAKY_SLOPE * h)
    hf = h.astype(jnp.bfloat16).astype(jnp.float32)
    return hf @ w2f + b2.reshape(1, -1)


def feature_mlp_ref_f32(x, w1, b1, w2, b2):
    h = x @ w1 + b1.reshape(1, -1)
    h = jnp.where(h >= 0, h, LEAKY_SLOPE * h)
    return h @ w2 + b2.reshape(1, -1)


# ---------------------------------------------------------------------------
# Demo / test
# ---------------------------------------------------------------------------
if __name__ == "__main__":
    # Shapes consistent with sub_net(feature_dim, hidden_dim, embed_dim).
    feature_dim = 128
    hidden_dim = 128
    embed_dim = 128

    key = jax.random.PRNGKey(0)
    k1, k2, k3, k4, kx = jax.random.split(key, 5)

    # Deterministic parameter init (stand-in for nn.Linear default init).
    w1 = (jax.random.uniform(k1, (feature_dim, hidden_dim), jnp.float32) - 0.5) * 0.1
    b1 = (jax.random.uniform(k2, (hidden_dim,), jnp.float32) - 0.5) * 0.1
    w2 = (jax.random.uniform(k3, (hidden_dim, embed_dim), jnp.float32) - 0.5) * 0.1
    b2 = (jax.random.uniform(k4, (embed_dim,), jnp.float32) - 0.5) * 0.1
    prepared = prepare_params(w1, b1, w2, b2)

    # Scene-graph output contract (per perf review): a single contiguous bf16
    # slab of object features plus per-image counts. None = no detections
    # (pass-through), 0 = an empty feature tensor, uneven counts exercise the
    # masked boundary tile and the multi-step parallel grid.
    counts = [8, None, 136, 0]
    total = sum(c for c in counts if c)
    object_slab = jax.random.normal(kx, (total, feature_dim), jnp.bfloat16)

    objects = process_objects_slab(object_slab, counts, prepared)
    objects = [jax.block_until_ready(o) if o is not None else None for o in objects]

    # Correctness: tight check vs matched-precision reference, loose vs f32.
    offset = 0
    for c, obj in zip(counts, objects):
        if c is None:
            assert obj is None
            continue
        feat = object_slab[offset:offset + c]
        offset += c
        assert obj.shape == (c, embed_dim)
        if c == 0:
            continue
        ref_m = feature_mlp_ref_matched(feat, w1, b1, w2, b2)
        ref_f = feature_mlp_ref_f32(feat.astype(jnp.float32), w1, b1, w2, b2)
        o32 = obj.astype(jnp.float32)
        assert jnp.allclose(o32, ref_m, atol=2e-2, rtol=2e-2), \
            "mismatch vs matched-precision reference"
        assert jnp.allclose(o32, ref_f, atol=6e-2, rtol=6e-2), \
            "mismatch vs f32 reference"

    print("KERNEL_OK")
</pallas_src>

<mosaic_0001>
module attributes {stable_mosaic.version = 11 : i64} {
  func.func @_feature_mlp_kernel(%arg0: i32, %arg1: memref<128x128xbf16, #tpu.memory_space<vmem>>, %arg2: memref<128x128xbf16, #tpu.memory_space<vmem>>, %arg3: memref<1x128xf32, #tpu.memory_space<vmem>>, %arg4: memref<128x128xbf16, #tpu.memory_space<vmem>>, %arg5: memref<1x128xf32, #tpu.memory_space<vmem>>, %arg6: memref<128x128xbf16, #tpu.memory_space<vmem>>) attributes {dimension_semantics = [#tpu.dimension_semantics<parallel>], iteration_bounds = array<i64: 2>, scalar_prefetch = 0 : i64, scratch_operands = 0 : i64, tpu.core_type = #tpu.core_type<tc>, window_params = [{transform_indices = @transform_0, window_bounds = array<i64: 128, 128>}, {pipeline_mode = #tpu.pipeline_mode<synchronous>, transform_indices = @transform_1, window_bounds = array<i64: 128, 128>}, {pipeline_mode = #tpu.pipeline_mode<synchronous>, transform_indices = @transform_2, window_bounds = array<i64: 1, 128>}, {pipeline_mode = #tpu.pipeline_mode<synchronous>, transform_indices = @transform_3, window_bounds = array<i64: 128, 128>}, {pipeline_mode = #tpu.pipeline_mode<synchronous>, transform_indices = @transform_4, window_bounds = array<i64: 1, 128>}, {transform_indices = @transform_5, window_bounds = array<i64: 128, 128>}]} {
    %c0 = arith.constant 0 : index
    %c0_0 = arith.constant 0 : index
    %0 = vector.load %arg1[%c0, %c0_0] : memref<128x128xbf16, #tpu.memory_space<vmem>>, vector<128x128xbf16>
    %c0_1 = arith.constant 0 : index
    %c0_2 = arith.constant 0 : index
    %1 = vector.load %arg2[%c0_1, %c0_2] : memref<128x128xbf16, #tpu.memory_space<vmem>>, vector<128x128xbf16>
    %cst = arith.constant dense<0.000000e+00> : vector<128x128xf32>
    %2 = tpu.matmul %0, %1, %cst {dimension_numbers = #tpu.dot_dimension_numbers<[1], [0], [0], [1], [0, 0, 1, 1], [], []>} : vector<128x128xbf16>, vector<128x128xbf16>, vector<128x128xf32> -> vector<128x128xf32>
    %c0_3 = arith.constant 0 : index
    %c0_4 = arith.constant 0 : index
    %3 = vector.load %arg3[%c0_3, %c0_4] : memref<1x128xf32, #tpu.memory_space<vmem>>, vector<1x128xf32>
    %4 = vector.broadcast %3 : vector<1x128xf32> to vector<128x128xf32>
    %5 = arith.addf %2, %4 : vector<128x128xf32>
    %cst_5 = arith.constant 0.00999999977 : f32
    %6 = vector.broadcast %cst_5 : f32 to vector<128x128xf32>
    %7 = arith.mulf %6, %5 : vector<128x128xf32>
    %8 = arith.maximumf %5, %7 : vector<128x128xf32>
    %9 = arith.truncf %8 : vector<128x128xf32> to vector<128x128xbf16>
    %c0_6 = arith.constant 0 : index
    %c0_7 = arith.constant 0 : index
    %10 = vector.load %arg4[%c0_6, %c0_7] : memref<128x128xbf16, #tpu.memory_space<vmem>>, vector<128x128xbf16>
    %cst_8 = arith.constant dense<0.000000e+00> : vector<128x128xf32>
    %11 = tpu.matmul %9, %10, %cst_8 {dimension_numbers = #tpu.dot_dimension_numbers<[1], [0], [0], [1], [0, 0, 1, 1], [], []>} : vector<128x128xbf16>, vector<128x128xbf16>, vector<128x128xf32> -> vector<128x128xf32>
    %c0_9 = arith.constant 0 : index
    %c0_10 = arith.constant 0 : index
    %12 = vector.load %arg5[%c0_9, %c0_10] : memref<1x128xf32, #tpu.memory_space<vmem>>, vector<1x128xf32>
    %13 = vector.broadcast %12 : vector<1x128xf32> to vector<128x128xf32>
    %14 = arith.addf %11, %13 : vector<128x128xf32>
    %15 = arith.truncf %14 : vector<128x128xf32> to vector<128x128xbf16>
    %c0_11 = arith.constant 0 : index
    %c0_12 = arith.constant 0 : index
    %16 = vector.load %arg6[%c0_11, %c0_12] : memref<128x128xbf16, #tpu.memory_space<vmem>>, vector<128x128xbf16>
    tpu.vector_store %arg6[%c0_11, %c0_12], %15 {strides = array<i32>} : memref<128x128xbf16, #tpu.memory_space<vmem>>, vector<128x128xbf16>,
    return
  }
  func.func @transform_0(%arg0: i32) -> (i32, i32) {
    %c0_i32 = arith.constant 0 : i32
    %c0_i32_0 = arith.constant 0 : i32
    return %arg0, %c0_i32 : i32, i32
  }
  func.func @transform_1(%arg0: i32) -> (i32, i32) {
    %c0_i32 = arith.constant 0 : i32
    %c0_i32_0 = arith.constant 0 : i32
    %c0_i32_1 = arith.constant 0 : i32
    return %c0_i32, %c0_i32_0 : i32, i32
  }
  func.func @transform_2(%arg0: i32) -> (i32, i32) {
    %c0_i32 = arith.constant 0 : i32
    %c0_i32_0 = arith.constant 0 : i32
    %c0_i32_1 = arith.constant 0 : i32
    return %c0_i32, %c0_i32_0 : i32, i32
  }
  func.func @transform_3(%arg0: i32) -> (i32, i32) {
    %c0_i32 = arith.constant 0 : i32
    %c0_i32_0 = arith.constant 0 : i32
    %c0_i32_1 = arith.constant 0 : i32
    return %c0_i32, %c0_i32_0 : i32, i32
  }
  func.func @transform_4(%arg0: i32) -> (i32, i32) {
    %c0_i32 = arith.constant 0 : i32
    %c0_i32_0 = arith.constant 0 : i32
    %c0_i32_1 = arith.constant 0 : i32
    return %c0_i32, %c0_i32_0 : i32, i32
  }
  func.func @transform_5(%arg0: i32) -> (i32, i32) {
    %c0_i32 = arith.constant 0 : i32
    %c0_i32_0 = arith.constant 0 : i32
    return %arg0, %c0_i32 : i32, i32
  }
}

</mosaic_0001>

<llo_original>
// kernel: tpu_custom_call.1
$region0: #{tpu_custom_call.1}
  #allocation0 [shape = 'u32[]', space=smem, size = 0x4, offset = 0x4, fixed_abs, tag = 'smem constant byte address 0x4 - core index']
  #allocation1 [shape = 'u32[144,128]{1,0:T(1,128)}', space=vmem, size = 0x12000, scoped, tag = 'internal scratch']
  %s0 = inlined_call_operand.hbm [shape: bf16[144,128], index: 0, kind: input, shape index: {}]
  %s1 = inlined_call_operand.hbm [shape: bf16[128,128], index: 1, kind: input, shape index: {}]
  %s2 = inlined_call_operand.vmem [shape: f32[1,128], index: 2, kind: input, shape index: {}]
  %s3 = inlined_call_operand.hbm [shape: bf16[128,128], index: 3, kind: input, shape index: {}]
  %s4 = inlined_call_operand.vmem [shape: f32[1,128], index: 4, kind: input, shape index: {}]
  %s5 = inlined_call_operand.hbm [shape: bf16[144,128], index: 5, kind: output, shape index: {}]
  %s6 = sld [smem:[#allocation0]]
  $region65: #{tpu_custom_call.1} parent=0
    _
  %s8 = ssub.s32 1, %s6
  %s9 = scalar_select 0, %s8, %s6
  $region1: #{tpu_custom_call.1} parent=0
    #allocation2 [shape = 'u8[65536]{0}', space=vmem, size = 0x10000, scoped, tag = 'input window, operand 0']
    #allocation3 [shape = 's32[2]{0}', space=sflag, size = 0x8, scoped, tag = 'scoped memory for tpu_custom_call.1']
    #allocation4 [shape = 's32[2]{0}', space=sflag, size = 0x8, scoped, tag = 'scoped memory for tpu_custom_call.1']
    #allocation5 [shape = 'u8[32768]{0}', space=vmem, size = 0x8000, scoped, tag = 'input window, operand 1, single buffered']
    #allocation6 [shape = 's32[1]{0}', space=sflag, size = 0x4, scoped, tag = 'scoped memory for tpu_custom_call.1']
    #allocation7 [shape = 'u8[32768]{0}', space=vmem, size = 0x8000, scoped, tag = 'input window, operand 3, single buffered']
    #allocation8 [shape = 'u8[65536]{0}', space=vmem, size = 0x10000, scoped, tag = 'output window, operand 0']
    %10 = vsyncpa [#allocation3], 0
    %s11 = scalar_lea.sflag [#allocation3], 1
    %12 = vsyncpa %s11, 0
    %13 = vsyncpa [#allocation6], 0
    %14 = vsyncpa [#allocation4], 0
    %s15 = scalar_lea.sflag [#allocation4], 1
    %16 = vsyncpa %s15, 0
    loop: start=0, step=1, limit=4
    $region2: #{tpu_custom_call.1} parent=1 // loop_pre_header
      _
    $region3: #{tpu_custom_call.1} parent=1 // loop_header
      %s18 = sphi 0, %s22
      %p19 = scmp.ge.s32.totalorder %s18, 4
      %s28 = sphi 0, %s30
      %s31 = sphi 0, %s28
      %s32 = sphi 0, %s31
      %s48 = sphi 0, %s32
      %s52 = sphi 0, %s52
      %s54 = sphi 0, %s52
      %s55 = sphi 0, %s54
      %s69 = sphi 0, %s55
      %s73 = sphi 0, %s73
      %s75 = sphi 0, %s73
      %s76 = sphi 0, %s75
      %s90 = sphi 0, %s76
      %s94 = sphi 0, %s94
      %s96 = sphi 0, %s94
      %s97 = sphi 0, %s96
      %s111 = sphi 0, %s97
      %s115 = sphi 0, %s115
      %s117 = sphi 0, %s115
      %s118 = sphi 0, %s117
      %s132 = sphi 0, %s118
      %s138 = sphi 0, %s140
      %s141 = sphi 0, %s138
      %s142 = sphi 0, %s141
      %s158 = sphi 0, %s142
    $region4: #{tpu_custom_call.1} parent=1 // loop_header_branch
      %21 = sbr.rel (%p19) target = $region8
    $region5: #{tpu_custom_call.1} parent=1 // loop_body
      %s23 = ssub.s32 %s18, 1
      %s24 = ssub.s32 %s18, 2
      %s25 = sadd.s32 %s18, 1
      %s26 = ssub.s32 %s18, %s25
      %p27 = scmp.eq.s32.totalorder %s26, 0
      %s29 = sadd.s32 %s28, 1
      %s30 = scalar_select %p27, %s28, %s29
      %p33 = pneg %p27
      %p34 = scmp.eq.s32.totalorder %s18, 1
      %p35 = por %p33, %p34
      %p36 = scmp.ne.s32.totalorder %s28, %s31
      %p37 = scmp.eq.s32.totalorder %s18, 0
      %p38 = por %p36, %p37
      %p39 = scmp.ne.s32.totalorder %s28, %s31
      %p40 = scmp.eq.s32.totalorder %s23, 1
      %p41 = por %p39, %p40
      %p42 = scmp.ne.s32.totalorder %s31, %s32
      %p43 = scmp.eq.s32.totalorder %s23, 0
      %p44 = por %p42, %p43
      %p45 = scmp.ne.s32.totalorder %s31, %s32
      %p46 = scmp.eq.s32.totalorder %s24, 1
      %p47 = por %p45, %p46
      %p49 = scmp.ne.s32.totalorder %s32, %s48
      %p50 = scmp.eq.s32.totalorder %s24, 0
      %p51 = por %p49, %p50
      %s53 = sadd.s32 %s52, 1
      %p56 = scmp.eq.s32.totalorder %s18, 1
      %p57 = scmp.ne.s32.totalorder %s52, %s54
      %p58 = scmp.eq.s32.totalorder %s18, 0
      %p59 = por %p57, %p58
      %p60 = scmp.ne.s32.totalorder %s52, %s54
      %p61 = scmp.eq.s32.totalorder %s23, 1
      %p62 = por %p60, %p61
      %p63 = scmp.ne.s32.totalorder %s54, %s55
      %p64 = scmp.eq.s32.totalorder %s23, 0
      %p65 = por %p63, %p64
      %p66 = scmp.ne.s32.totalorder %s54, %s55
      %p67 = scmp.eq.s32.totalorder %s24, 1
      %p68 = por %p66, %p67
      %p70 = scmp.ne.s32.totalorder %s55, %s69
      %p71 = scmp.eq.s32.totalorder %s24, 0
      %p72 = por %p70, %p71
      %s74 = sadd.s32 %s73, 1
      %p77 = scmp.eq.s32.totalorder %s18, 1
      %p78 = scmp.ne.s32.totalorder %s73, %s75
      %p79 = scmp.eq.s32.totalorder %s18, 0
      %p80 = por %p78, %p79
      %p81 = scmp.ne.s32.totalorder %s73, %s75
      %p82 = scmp.eq.s32.totalorder %s23, 1
      %p83 = por %p81, %p82
      %p84 = scmp.ne.s32.totalorder %s75, %s76
      %p85 = scmp.eq.s32.totalorder %s23, 0
      %p86 = por %p84, %p85
      %p87 = scmp.ne.s32.totalorder %s75, %s76
      %p88 = scmp.eq.s32.totalorder %s24, 1
      %p89 = por %p87, %p88
      %p91 = scmp.ne.s32.totalorder %s76, %s90
      %p92 = scmp.eq.s32.totalorder %s24, 0
      %p93 = por %p91, %p92
      %s95 = sadd.s32 %s94, 1
      %p98 = scmp.eq.s32.totalorder %s18, 1
      %p99 = scmp.ne.s32.totalorder %s94, %s96
      %p100 = scmp.eq.s32.totalorder %s18, 0
      %p101 = por %p99, %p100
      %p102 = scmp.ne.s32.totalorder %s94, %s96
      %p103 = scmp.eq.s32.totalorder %s23, 1
      %p104 = por %p102, %p103
      %p105 = scmp.ne.s32.totalorder %s96, %s97
      %p106 = scmp.eq.s32.totalorder %s23, 0
      %p107 = por %p105, %p106
      %p108 = scmp.ne.s32.totalorder %s96, %s97
      %p109 = scmp.eq.s32.totalorder %s24, 1
      %p110 = por %p108, %p109
      %p112 = scmp.ne.s32.totalorder %s97, %s111
      %p113 = scmp.eq.s32.totalorder %s24, 0
      %p114 = por %p112, %p113
      %s116 = sadd.s32 %s115, 1
      %p119 = scmp.eq.s32.totalorder %s18, 1
      %p120 = scmp.ne.s32.totalorder %s115, %s117
      %p121 = scmp.eq.s32.totalorder %s18, 0
      %p122 = por %p120, %p121
      %p123 = scmp.ne.s32.totalorder %s115, %s117
      %p124 = scmp.eq.s32.totalorder %s23, 1
      %p125 = por %p123, %p124
      %p126 = scmp.ne.s32.totalorder %s117, %s118
      %p127 = scmp.eq.s32.totalorder %s23, 0
      %p128 = por %p126, %p127
      %p129 = scmp.ne.s32.totalorder %s117, %s118
      %p130 = scmp.eq.s32.totalorder %s24, 1
      %p131 = por %p129, %p130
      %p133 = scmp.ne.s32.totalorder %s118, %s132
      %p134 = scmp.eq.s32.totalorder %s24, 0
      %p135 = por %p133, %p134
      %s136 = ssub.s32 %s18, %s25
      %p137 = scmp.eq.s32.totalorder %s136, 0
      %s139 = sadd.s32 %s138, 1
      %s140 = scalar_select %p137, %s138, %s139
      %p143 = pneg %p137
      %p144 = scmp.eq.s32.totalorder %s18, 1
      %p145 = por %p143, %p144
      %p146 = scmp.ne.s32.totalorder %s138, %s141
      %p147 = scmp.eq.s32.totalorder %s18, 0
      %p148 = por %p146, %p147
      %p149 = scmp.ne.s32.totalorder %s138, %s141
      %p150 = scmp.eq.s32.totalorder %s23, 1
      %p151 = por %p149, %p150
      %p152 = scmp.ne.s32.totalorder %s141, %s142
      %p153 = scmp.eq.s32.totalorder %s23, 0
      %p154 = por %p152, %p153
      %p155 = scmp.ne.s32.totalorder %s141, %s142
      %p156 = scmp.eq.s32.totalorder %s24, 1
      %p157 = por %p155, %p156
      %p159 = scmp.ne.s32.totalorder %s142, %s158
      %p160 = scmp.eq.s32.totalorder %s24, 0
      %p161 = por %p159, %p160
      %p162 = scmp.le.s32.totalorder 1, %s18
      %p163 = scmp.lt.s32.totalorder %s18, 3
      %p164 = pnand %p162, %p163
      %p165 = pneg %p164
      // Predicated region
      $region9: #{tpu_custom_call.1} parent=5 // pred_check
        _
      $region10: #{tpu_custom_call.1} parent=5 // pred_check_branch
        %167 = sbr.rel (%p164) target = $region12
      $region11: #{tpu_custom_call.1} parent=5 // pred_region
        %s168 = ssub.s32 %s18, 1
        // Predicated region
        $region13: #{tpu_custom_call.1} parent=11 // pred_check
          %p169 = pneg %p65
        $region14: #{tpu_custom_call.1} parent=11 // pred_check_branch
          %171 = sbr.rel (%p169) target = $region16
        $region15: #{tpu_custom_call.1} parent=11 // pred_region
          %s173 = ssub.s32 1024, 1024
          %174 = vsyncadd [#allocation6], %s173
          %s175 = sshll.u32 [#allocation5], 4
          %s176 = int_to_ptr.vmem [resolvable:$true] %s175
          %181 = dma.hbm_to_vmem [thread:$0]  %s1, 1024, %s176, [#allocation6], 64, 64, 4
        $region16: #{tpu_custom_call.1} parent=11 // pred_fallthru
          _
        // Predicated region
        $region17: #{tpu_custom_call.1} parent=11 // pred_check
          %p182 = pneg %p86
        $region18: #{tpu_custom_call.1} parent=11 // pred_check_branch
          %184 = sbr.rel (%p182) target = $region20
        $region19: #{tpu_custom_call.1} parent=11 // pred_region
          _
        $region20: #{tpu_custom_call.1} parent=11 // pred_fallthru
          _
        // Predicated region
        $region21: #{tpu_custom_call.1} parent=11 // pred_check
          %p185 = pneg %p107
        $region22: #{tpu_custom_call.1} parent=11 // pred_check_branch
          %187 = sbr.rel (%p185) target = $region24
        $region23: #{tpu_custom_call.1} parent=11 // pred_region
          %s189 = ssub.s32 1024, 1024
          %190 = vsyncadd [#allocation6], %s189
          %s191 = sshll.u32 [#allocation7], 4
          %s192 = int_to_ptr.vmem [resolvable:$true] %s191
          %197 = dma.hbm_to_vmem [thread:$0]  %s3, 1024, %s192, [#allocation6], 64, 64, 4
        $region24: #{tpu_custom_call.1} parent=11 // pred_fallthru
          _
        // Predicated region
        $region25: #{tpu_custom_call.1} parent=11 // pred_check
          %p198 = pneg %p128
        $region26: #{tpu_custom_call.1} parent=11 // pred_check_branch
          %200 = sbr.rel (%p198) target = $region28
        $region27: #{tpu_custom_call.1} parent=11 // pred_region
          _
        $region28: #{tpu_custom_call.1} parent=11 // pred_fallthru
          _
      $region12: #{tpu_custom_call.1} parent=5 // pred_fallthru
        _
      %p201 = scmp.lt.s32.totalorder %s18, 2
      // Predicated region
      $region29: #{tpu_custom_call.1} parent=5 // pred_check
        %p202 = pneg %p201
      $region30: #{tpu_custom_call.1} parent=5 // pred_check_branch
        %204 = sbr.rel (%p202) target = $region32
      $region31: #{tpu_custom_call.1} parent=5 // pred_region
        // Predicated region
        $region33: #{tpu_custom_call.1} parent=31 // pred_check
          %p205 = pneg %p38
        $region34: #{tpu_custom_call.1} parent=31 // pred_check_branch
          %207 = sbr.rel (%p205) target = $region36
        $region35: #{tpu_custom_call.1} parent=31 // pred_region
          %s208 = sand.u32 %s28, 1
          %s209 = scalar_lea.sflag [#allocation3], %s208
          %s210 = sand.u32 %s28, 1
          %s211 = smul.addr %s210, 64
          %s212 = scalar_lea.vmem [#allocation2], %s211
          %s213 = smul.u32 16, %s18
          %s214 = ssub.s32 18, %s213
          %p215 = scmp.lt.s32.totalorder %s214, 16
          %s216 = scalar_select %p215, %s214, 16
          %s217 = smul.u32 64, %s216
          %s219 = ssub.s32 1024, %s217
          %220 = vsyncadd %s209, %s219
          %p221 = scmp.ne.s32.totalorder 0, %s217
          %s222 = smul.addr %s213, 64
          %s223 = scalar_lea.hbm %s0, %s222
          %s224 = smul.u32 4, %s216
          %s225 = sshll.u32 %s212, 4
          %s226 = int_to_ptr.vmem [resolvable:$true] %s225
          %s227 = sshll.u32 %s224, 4
          %231 = dma.hbm_to_vmem [thread:$0]  (%p221), %s223, %s227, %s226, %s209, 64, 64, 4
        $region36: #{tpu_custom_call.1} parent=31 // pred_fallthru
          _
      $region32: #{tpu_custom_call.1} parent=5 // pred_fallthru
        _
      %p232 = scmp.le.s32.totalorder 1, %s18
      %p233 = scmp.lt.s32.totalorder %s18, 3
      %p234 = pnand %p232, %p233
      %p235 = pneg %p234
      // Predicated region
      $region37: #{tpu_custom_call.1} parent=5 // pred_check
        _
      $region38: #{tpu_custom_call.1} parent=5 // pred_check_branch
        %237 = sbr.rel (%p234) target = $region40
      $region39: #{tpu_custom_call.1} parent=5 // pred_region
        %s238 = ssub.s32 %s18, 1
        %s239 = sand.u32 %s31, 1
        %s240 = scalar_lea.sflag [#allocation3], %s239
        %s241 = sand.u32 %s31, 1
        %s242 = smul.addr %s241, 64
        %s243 = scalar_lea.vmem [#allocation2], %s242
        // Predicated region
        $region41: #{tpu_custom_call.1} parent=39 // pred_check
          %p244 = pneg %p44
        $region42: #{tpu_custom_call.1} parent=39 // pred_check_branch
          %246 = sbr.rel (%p244) target = $region44
        $region43: #{tpu_custom_call.1} parent=39 // pred_region
          %247 = dma.done %s240, 1024
        $region44: #{tpu_custom_call.1} parent=39 // pred_fallthru
          _
        // Predicated region
        $region45: #{tpu_custom_call.1} parent=39 // pred_check
          %p248 = pneg %p65
        $region46: #{tpu_custom_call.1} parent=39 // pred_check_branch
          %250 = sbr.rel (%p248) target = $region48
        $region47: #{tpu_custom_call.1} parent=39 // pred_region
          %251 = dma.done [#allocation6], 1024
        $region48: #{tpu_custom_call.1} parent=39 // pred_fallthru
          _
        // Predicated region
        $region49: #{tpu_custom_call.1} parent=39 // pred_check
          %p252 = pneg %p107
        $region50: #{tpu_custom_call.1} parent=39 // pred_check_branch
          %254 = sbr.rel (%p252) target = $region52
        $region51: #{tpu_custom_call.1} parent=39 // pred_region
          %255 = dma.done [#allocation6], 1024
        $region52: #{tpu_custom_call.1} parent=39 // pred_fallthru
          _
        %s256 = sand.u32 %s31, 1
        %s257 = scalar_lea.sflag [#allocation3], %s256
        %s258 = sand.u32 %s31, 1
        %s259 = smul.addr %s258, 64
        %s260 = scalar_lea.vmem [#allocation2], %s259
        %p261 = pneg %p44
        %p262 = pneg %p41
        %p263 = pneg %p65
        %p264 = pneg %p62
        %p265 = pneg %p86
        %p266 = pneg %p83
        %p267 = pneg %p107
        %p268 = pneg %p104
        %p269 = pneg %p128
        %p270 = pneg %p125
        %p271 = pneg %p154
        %p272 = pneg %p151
        %s273 = sand.u32 %s141, 1
        %s274 = scalar_lea.sflag [#allocation4], %s273
        %s275 = sand.u32 %s141, 1
        %s276 = smul.addr %s275, 64
        %s277 = scalar_lea.vmem [#allocation8], %s276
        %s278 = smul.u32 16, %s23
        %s279 = ssub.s32 18, %s278
        %p280 = scmp.lt.s32.totalorder %s279, 16
        %s281 = scalar_select %p280, %s279, 16
        %s282 = smul.u32 64, %s281
        %s283 = smul.u32 16, %s23
        %s284 = ssub.s32 18, %s283
        %p285 = scmp.lt.s32.totalorder %s284, 16
        %s286 = scalar_select %p285, %s284, 16
        %s287 = smul.u32 64, %s286
        %v289 = vld [vmem:[%s243] sm:$0xf]
        %v290 = vld [vmem:[%s243 + $0x4] sm:$0xf]
        %v291 = vld [vmem:[%s243 + $0x8] sm:$0xf]
        %v292 = vld [vmem:[%s243 + $0xc] sm:$0xf]
        %v293 = vld [vmem:[%s243 + $0x10] sm:$0xf]
        %v294 = vld [vmem:[%s243 + $0x14] sm:$0xf]
        %v295 = vld [vmem:[%s243 + $0x18] sm:$0xf]
        %v296 = vld [vmem:[%s243 + $0x1c] sm:$0xf]
        %v297 = vld [vmem:[%s243 + $0x20] sm:$0xf]
        %v298 = vld [vmem:[%s243 + $0x24] sm:$0xf]
        %v299 = vld [vmem:[%s243 + $0x28] sm:$0xf]
        %v300 = vld [vmem:[%s243 + $0x2c] sm:$0xf]
        %v301 = vld [vmem:[%s243 + $0x30] sm:$0xf]
        %v302 = vld [vmem:[%s243 + $0x34] sm:$0xf]
        %v303 = vld [vmem:[%s243 + $0x38] sm:$0xf]
        %v304 = vld [vmem:[%s243 + $0x3c] sm:$0xf]
        %v305 = vld [vmem:[#allocation5] sm:$0xf]
        %v306 = vld [vmem:[#allocation5 + $0x4] sm:$0xf]
        %v307 = vld [vmem:[#allocation5 + $0x8] sm:$0xf]
        %v308 = vld [vmem:[#allocation5 + $0xc] sm:$0xf]
        %v309 = vld [vmem:[#allocation5 + $0x10] sm:$0xf]
        %v310 = vld [vmem:[#allocation5 + $0x14] sm:$0xf]
        %v311 = vld [vmem:[#allocation5 + $0x18] sm:$0xf]
        %v312 = vld [vmem:[#allocation5 + $0x1c] sm:$0xf]
        %v313 = vld [vmem:[#allocation5 + $0x20] sm:$0xf]
        %v314 = vld [vmem:[#allocation5 + $0x24] sm:$0xf]
        %v315 = vld [vmem:[#allocation5 + $0x28] sm:$0xf]
        %v316 = vld [vmem:[#allocation5 + $0x2c] sm:$0xf]
        %v317 = vld [vmem:[#allocation5 + $0x30] sm:$0xf]
        %v318 = vld [vmem:[#allocation5 + $0x34] sm:$0xf]
        %v319 = vld [vmem:[#allocation5 + $0x38] sm:$0xf]
        %v320 = vld [vmem:[#allocation5 + $0x3c] sm:$0xf]
        %v321 = vld [vmem:[%s2] sm:$0x1]
        %v323 = vlaneseq
        %v324 = vshrl.u32 %v323, 7
        %v325 = vsub.s32 0, %v324
        %v326 = vrot.slane %v321, %v325
        %v344 = vunpack.c.l.b16 %v289
        %v345 = vunpack.c.l.b16 %v290
        %v346 = vunpack.c.l.b16 %v291
        %v347 = vunpack.c.l.b16 %v292
        %v348 = vunpack.c.l.b16 %v293
        %v349 = vunpack.c.l.b16 %v294
        %v350 = vunpack.c.l.b16 %v295
        %v351 = vunpack.c.l.b16 %v296
        %v352 = vunpack.c.l.b16 %v297
        %v353 = vunpack.c.l.b16 %v298
        %v354 = vunpack.c.l.b16 %v299
        %v355 = vunpack.c.l.b16 %v300
        %v356 = vunpack.c.l.b16 %v301
        %v357 = vunpack.c.l.b16 %v302
        %v358 = vunpack.c.l.b16 %v303
        %v359 = vunpack.c.l.b16 %v304
        %v360 = vpack.c.b16 %v345, %v344
        %v361 = vpack.c.b16 %v347, %v346
        %v362 = vpack.c.b16 %v349, %v348
        %v363 = vpack.c.b16 %v351, %v350
        %v364 = vpack.c.b16 %v353, %v352
        %v365 = vpack.c.b16 %v355, %v354
        %v366 = vpack.c.b16 %v357, %v356
        %v367 = vpack.c.b16 %v359, %v358
        %v392 = vunpack.c.l.b16 %v305
        %v393 = vunpack.c.l.b16 %v306
        %v394 = vunpack.c.l.b16 %v307
        %v395 = vunpack.c.l.b16 %v308
        %v396 = vunpack.c.l.b16 %v309
        %v397 = vunpack.c.l.b16 %v310
        %v398 = vunpack.c.l.b16 %v311
        %v399 = vunpack.c.l.b16 %v312
        %v400 = vunpack.c.l.b16 %v313
        %v401 = vunpack.c.l.b16 %v314
        %v402 = vunpack.c.l.b16 %v315
        %v403 = vunpack.c.l.b16 %v316
        %v404 = vunpack.c.l.b16 %v317
        %v405 = vunpack.c.l.b16 %v318
        %v406 = vunpack.c.l.b16 %v319
        %v407 = vunpack.c.l.b16 %v320
        %v408 = vpack.c.b16 %v393, %v392
        %v409 = vpack.c.b16 %v395, %v394
        %v410 = vpack.c.b16 %v397, %v396
        %v411 = vpack.c.b16 %v399, %v398
        %v412 = vpack.c.b16 %v401, %v400
        %v413 = vpack.c.b16 %v403, %v402
        %v414 = vpack.c.b16 %v405, %v404
        %v415 = vpack.c.b16 %v407, %v406
        %424 = vmatprep.subr.bf16.mxu0 0
        %425 = vmatpush1.bf16.msra.mxu0 %v415
        %426 = vmatprep.subr.bf16.mxu0 0
        %427 = vmatpush1.bf16.msra.mxu0 %v414
        %428 = vmatprep.subr.bf16.mxu0 0
        %429 = vmatpush1.bf16.msra.mxu0 %v413
        %430 = vmatprep.subr.bf16.mxu0 0
        %431 = vmatpush1.bf16.msra.mxu0 %v412
        %432 = vmatprep.subr.bf16.mxu0 0
        %433 = vmatpush1.bf16.msra.mxu0 %v411
        %434 = vmatprep.subr.bf16.mxu0 0
        %435 = vmatpush1.bf16.msra.mxu0 %v410
        %436 = vmatprep.subr.bf16.mxu0 0
        %437 = vmatpush1.bf16.msra.mxu0 %v409
        %438 = vmatprep.subr.bf16.mxu0 0
        %439 = vmatpush1.bf16.msra.mxu0 %v408
        %440 = vmatprep.subr.bf16.mxu0 0
        %441 = vmatpush2.bf16.msra.mxu0 0
        %442 = vmatprep.subr.bf16.mxu0 0
        %443 = vmatpush2.bf16.msra.mxu0 0
        %444 = vmatprep.subr.bf16.mxu0 0
        %445 = vmatpush2.bf16.msra.mxu0 0
        %446 = vmatprep.subr.bf16.mxu0 0
        %447 = vmatpush2.bf16.msra.mxu0 0
        %448 = vmatprep.subr.bf16.mxu0 0
        %449 = vmatpush2.bf16.msra.mxu0 0
        %450 = vmatprep.subr.bf16.mxu0 0
        %451 = vmatpush2.bf16.msra.mxu0 0
        %452 = vmatprep.subr.bf16.mxu0 0
        %453 = vmatpush2.bf16.msra.mxu0 0
        %454 = vmatprep.subr.bf16.mxu0 0
        %455 = vmatpush2.bf16.msra.mxu0 0
        %456 = vmatprep.mubr.bf16.mxu0 0
        %457 = vmatmul.mubr.bf16.gmra.mxu0 %v360
        %v458 = vpop.f32.mrf.mxu0
        %v459 = vadd.f32 %v326, %v458
        %v460 = vpop.f32.mrf.mxu0
        %v461 = vpop.f32.mrf.mxu0
        %v462 = vadd.f32 %v326, %v461
        %v463 = vpop.f32.mrf.mxu0
        %464 = vmatprep.mubr.bf16.mxu0 0
        %465 = vmatmul.mubr.bf16.gmra.mxu0 %v361
        %v466 = vpop.f32.mrf.mxu0
        %v467 = vadd.f32 %v326, %v466
        %v468 = vpop.f32.mrf.mxu0
        %v469 = vpop.f32.mrf.mxu0
        %v470 = vadd.f32 %v326, %v469
        %v471 = vpop.f32.mrf.mxu0
        %472 = vmatprep.mubr.bf16.mxu0 0
        %473 = vmatmul.mubr.bf16.gmra.mxu0 %v362
        %v474 = vpop.f32.mrf.mxu0
        %v475 = vadd.f32 %v326, %v474
        %v476 = vpop.f32.mrf.mxu0
        %v477 = vpop.f32.mrf.mxu0
        %v478 = vadd.f32 %v326, %v477
        %v479 = vpop.f32.mrf.mxu0
        %480 = vmatprep.mubr.bf16.mxu0 0
        %481 = vmatmul.mubr.bf16.gmra.mxu0 %v363
        %v482 = vpop.f32.mrf.mxu0
        %v483 = vadd.f32 %v326, %v482
        %v484 = vpop.f32.mrf.mxu0
        %v485 = vpop.f32.mrf.mxu0
        %v486 = vadd.f32 %v326, %v485
        %v487 = vpop.f32.mrf.mxu0
        %488 = vmatprep.mubr.bf16.mxu0 0
        %489 = vmatmul.mubr.bf16.gmra.mxu0 %v364
        %v490 = vpop.f32.mrf.mxu0
        %v491 = vadd.f32 %v326, %v490
        %v492 = vpop.f32.mrf.mxu0
        %v493 = vpop.f32.mrf.mxu0
        %v494 = vadd.f32 %v326, %v493
        %v495 = vpop.f32.mrf.mxu0
        %496 = vmatprep.mubr.bf16.mxu0 0
        %497 = vmatmul.mubr.bf16.gmra.mxu0 %v365
        %v498 = vpop.f32.mrf.mxu0
        %v499 = vadd.f32 %v326, %v498
        %v500 = vpop.f32.mrf.mxu0
        %v501 = vpop.f32.mrf.mxu0
        %v502 = vadd.f32 %v326, %v501
        %v503 = vpop.f32.mrf.mxu0
        %504 = vmatprep.mubr.bf16.mxu0 0
        %505 = vmatmul.mubr.bf16.gmra.mxu0 %v366
        %v506 = vpop.f32.mrf.mxu0
        %v507 = vadd.f32 %v326, %v506
        %v508 = vpop.f32.mrf.mxu0
        %v509 = vpop.f32.mrf.mxu0
        %v510 = vadd.f32 %v326, %v509
        %v511 = vpop.f32.mrf.mxu0
        %512 = vmatprep.mubr.bf16.mxu0 0
        %513 = vmatmul.mubr.bf16.gmra.mxu0 %v367
        %v514 = vpop.f32.mrf.mxu0
        %v515 = vadd.f32 %v326, %v514
        %v516 = vpop.f32.mrf.mxu0
        %v517 = vpop.f32.mrf.mxu0
        %v518 = vadd.f32 %v326, %v517
        %v519 = vpop.f32.mrf.mxu0
        %520 = vdwg.mxu0
        %v521 = vmul.f32 %v459, 0.01
        %v522 = vmul.f32 %v462, 0.01
        %v523 = vmul.f32 %v467, 0.01
        %v524 = vmul.f32 %v470, 0.01
        %v525 = vmul.f32 %v475, 0.01
        %v526 = vmul.f32 %v478, 0.01
        %v527 = vmul.f32 %v483, 0.01
        %v528 = vmul.f32 %v486, 0.01
        %v529 = vmul.f32 %v491, 0.01
        %v530 = vmul.f32 %v494, 0.01
        %v531 = vmul.f32 %v499, 0.01
        %v532 = vmul.f32 %v502, 0.01
        %v533 = vmul.f32 %v507, 0.01
        %v534 = vmul.f32 %v510, 0.01
        %v535 = vmul.f32 %v515, 0.01
        %v536 = vmul.f32 %v518, 0.01
        %v537 = vmax.f32 %v459, %v521
        %v538 = vmax.f32 %v462, %v522
        %v539 = vmax.f32 %v467, %v523
        %v540 = vmax.f32 %v470, %v524
        %v541 = vmax.f32 %v475, %v525
        %v542 = vmax.f32 %v478, %v526
        %v543 = vmax.f32 %v483, %v527
        %v544 = vmax.f32 %v486, %v528
        %v545 = vmax.f32 %v491, %v529
        %v546 = vmax.f32 %v494, %v530
        %v547 = vmax.f32 %v499, %v531
        %v548 = vmax.f32 %v502, %v532
        %v549 = vmax.f32 %v507, %v533
        %v550 = vmax.f32 %v510, %v534
        %v551 = vmax.f32 %v515, %v535
        %v552 = vmax.f32 %v518, %v536
        %v553 = vpack.c.bf16 %v538, %v537
        %v554 = vpack.c.bf16 %v540, %v539
        %v555 = vpack.c.bf16 %v542, %v541
        %v556 = vpack.c.bf16 %v544, %v543
        %v557 = vpack.c.bf16 %v546, %v545
        %v558 = vpack.c.bf16 %v548, %v547
        %v559 = vpack.c.bf16 %v550, %v549
        %v560 = vpack.c.bf16 %v552, %v551
        %v561 = vld [vmem:[#allocation7] sm:$0xf]
        %v562 = vld [vmem:[#allocation7 + $0x4] sm:$0xf]
        %v563 = vld [vmem:[#allocation7 + $0x8] sm:$0xf]
        %v564 = vld [vmem:[#allocation7 + $0xc] sm:$0xf]
        %v565 = vld [vmem:[#allocation7 + $0x10] sm:$0xf]
        %v566 = vld [vmem:[#allocation7 + $0x14] sm:$0xf]
        %v567 = vld [vmem:[#allocation7 + $0x18] sm:$0xf]
        %v568 = vld [vmem:[#allocation7 + $0x1c] sm:$0xf]
        %v569 = vld [vmem:[#allocation7 + $0x20] sm:$0xf]
        %v570 = vld [vmem:[#allocation7 + $0x24] sm:$0xf]
        %v571 = vld [vmem:[#allocation7 + $0x28] sm:$0xf]
        %v572 = vld [vmem:[#allocation7 + $0x2c] sm:$0xf]
        %v573 = vld [vmem:[#allocation7 + $0x30] sm:$0xf]
        %v574 = vld [vmem:[#allocation7 + $0x34] sm:$0xf]
        %v575 = vld [vmem:[#allocation7 + $0x38] sm:$0xf]
        %v576 = vld [vmem:[#allocation7 + $0x3c] sm:$0xf]
        %v577 = vld [vmem:[%s4] sm:$0x1]
        %v579 = vlaneseq
        %v580 = vshrl.u32 %v579, 7
        %v581 = vsub.s32 0, %v580
        %v582 = vrot.slane %v577, %v581
        %v600 = vunpack.c.l.b16 %v561
        %v601 = vunpack.c.l.b16 %v562
        %v602 = vunpack.c.l.b16 %v563
        %v603 = vunpack.c.l.b16 %v564
        %v604 = vunpack.c.l.b16 %v565
        %v605 = vunpack.c.l.b16 %v566
        %v606 = vunpack.c.l.b16 %v567
        %v607 = vunpack.c.l.b16 %v568
        %v608 = vunpack.c.l.b16 %v569
        %v609 = vunpack.c.l.b16 %v570
        %v610 = vunpack.c.l.b16 %v571
        %v611 = vunpack.c.l.b16 %v572
        %v612 = vunpack.c.l.b16 %v573
        %v613 = vunpack.c.l.b16 %v574
        %v614 = vunpack.c.l.b16 %v575
        %v615 = vunpack.c.l.b16 %v576
        %v616 = vpack.c.b16 %v601, %v600
        %v617 = vpack.c.b16 %v603, %v602
        %v618 = vpack.c.b16 %v605, %v604
        %v619 = vpack.c.b16 %v607, %v606
        %v620 = vpack.c.b16 %v609, %v608
        %v621 = vpack.c.b16 %v611, %v610
        %v622 = vpack.c.b16 %v613, %v612
        %v623 = vpack.c.b16 %v615, %v614
        %632 = vmatprep.subr.bf16.mxu0 0
        %633 = vmatpush1.bf16.msra.mxu0 %v623
        %634 = vmatprep.subr.bf16.mxu0 0
        %635 = vmatpush1.bf16.msra.mxu0 %v622
        %636 = vmatprep.subr.bf16.mxu0 0
        %637 = vmatpush1.bf16.msra.mxu0 %v621
        %638 = vmatprep.subr.bf16.mxu0 0
        %639 = vmatpush1.bf16.msra.mxu0 %v620
        %640 = vmatprep.subr.bf16.mxu0 0
        %641 = vmatpush1.bf16.msra.mxu0 %v619
        %642 = vmatprep.subr.bf16.mxu0 0
        %643 = vmatpush1.bf16.msra.mxu0 %v618
        %644 = vmatprep.subr.bf16.mxu0 0
        %645 = vmatpush1.bf16.msra.mxu0 %v617
        %646 = vmatprep.subr.bf16.mxu0 0
        %647 = vmatpush1.bf16.msra.mxu0 %v616
        %648 = vmatprep.subr.bf16.mxu0 0
        %649 = vmatpush2.bf16.msra.mxu0 0
        %650 = vmatprep.subr.bf16.mxu0 0
        %651 = vmatpush2.bf16.msra.mxu0 0
        %652 = vmatprep.subr.bf16.mxu0 0
        %653 = vmatpush2.bf16.msra.mxu0 0
        %654 = vmatprep.subr.bf16.mxu0 0
        %655 = vmatpush2.bf16.msra.mxu0 0
        %656 = vmatprep.subr.bf16.mxu0 0
        %657 = vmatpush2.bf16.msra.mxu0 0
        %658 = vmatprep.subr.bf16.mxu0 0
        %659 = vmatpush2.bf16.msra.mxu0 0
        %660 = vmatprep.subr.bf16.mxu0 0
        %661 = vmatpush2.bf16.msra.mxu0 0
        %662 = vmatprep.subr.bf16.mxu0 0
        %663 = vmatpush2.bf16.msra.mxu0 0
        %664 = vmatprep.mubr.bf16.mxu0 0
        %665 = vmatmul.mubr.bf16.gmra.mxu0 %v553
        %v666 = vpop.f32.mrf.mxu0
        %v667 = vadd.f32 %v582, %v666
        %v668 = vpop.f32.mrf.mxu0
        %v669 = vpop.f32.mrf.mxu0
        %v670 = vadd.f32 %v582, %v669
        %v671 = vpop.f32.mrf.mxu0
        %672 = vmatprep.mubr.bf16.mxu0 0
        %673 = vmatmul.mubr.bf16.gmra.mxu0 %v554
        %v674 = vpop.f32.mrf.mxu0
        %v675 = vadd.f32 %v582, %v674
        %v676 = vpop.f32.mrf.mxu0
        %v677 = vpop.f32.mrf.mxu0
        %v678 = vadd.f32 %v582, %v677
        %v679 = vpop.f32.mrf.mxu0
        %680 = vmatprep.mubr.bf16.mxu0 0
        %681 = vmatmul.mubr.bf16.gmra.mxu0 %v555
        %v682 = vpop.f32.mrf.mxu0
        %v683 = vadd.f32 %v582, %v682
        %v684 = vpop.f32.mrf.mxu0
        %v685 = vpop.f32.mrf.mxu0
        %v686 = vadd.f32 %v582, %v685
        %v687 = vpop.f32.mrf.mxu0
        %688 = vmatprep.mubr.bf16.mxu0 0
        %689 = vmatmul.mubr.bf16.gmra.mxu0 %v556
        %v690 = vpop.f32.mrf.mxu0
        %v691 = vadd.f32 %v582, %v690
        %v692 = vpop.f32.mrf.mxu0
        %v693 = vpop.f32.mrf.mxu0
        %v694 = vadd.f32 %v582, %v693
        %v695 = vpop.f32.mrf.mxu0
        %696 = vmatprep.mubr.bf16.mxu0 0
        %697 = vmatmul.mubr.bf16.gmra.mxu0 %v557
        %v698 = vpop.f32.mrf.mxu0
        %v699 = vadd.f32 %v582, %v698
        %v700 = vpop.f32.mrf.mxu0
        %v701 = vpop.f32.mrf.mxu0
        %v702 = vadd.f32 %v582, %v701
        %v703 = vpop.f32.mrf.mxu0
        %704 = vmatprep.mubr.bf16.mxu0 0
        %705 = vmatmul.mubr.bf16.gmra.mxu0 %v558
        %v706 = vpop.f32.mrf.mxu0
        %v707 = vadd.f32 %v582, %v706
        %v708 = vpop.f32.mrf.mxu0
        %v709 = vpop.f32.mrf.mxu0
        %v710 = vadd.f32 %v582, %v709
        %v711 = vpop.f32.mrf.mxu0
        %712 = vmatprep.mubr.bf16.mxu0 0
        %713 = vmatmul.mubr.bf16.gmra.mxu0 %v559
        %v714 = vpop.f32.mrf.mxu0
        %v715 = vadd.f32 %v582, %v714
        %v716 = vpop.f32.mrf.mxu0
        %v717 = vpop.f32.mrf.mxu0
        %v718 = vadd.f32 %v582, %v717
        %v719 = vpop.f32.mrf.mxu0
        %720 = vmatprep.mubr.bf16.mxu0 0
        %721 = vmatmul.mubr.bf16.gmra.mxu0 %v560
        %v722 = vpop.f32.mrf.mxu0
        %v723 = vadd.f32 %v582, %v722
        %v724 = vpop.f32.mrf.mxu0
        %v725 = vpop.f32.mrf.mxu0
        %v726 = vadd.f32 %v582, %v725
        %v727 = vpop.f32.mrf.mxu0
        %728 = vdwg.mxu0
        %v729 = vpack.c.bf16 %v670, %v667
        %v730 = vpack.c.bf16 %v678, %v675
        %v731 = vpack.c.bf16 %v686, %v683
        %v732 = vpack.c.bf16 %v694, %v691
        %v733 = vpack.c.bf16 %v702, %v699
        %v734 = vpack.c.bf16 %v710, %v707
        %v735 = vpack.c.bf16 %v718, %v715
        %v736 = vpack.c.bf16 %v726, %v723
        %v745 = vunpack.c.l.b16 %v729
        %v746 = vunpack.c.h.b16 %v729
        %v747 = vunpack.c.l.b16 %v730
        %v748 = vunpack.c.h.b16 %v730
        %v749 = vunpack.c.l.b16 %v731
        %v750 = vunpack.c.h.b16 %v731
        %v751 = vunpack.c.l.b16 %v732
        %v752 = vunpack.c.h.b16 %v732
        %v753 = vunpack.c.l.b16 %v733
        %v754 = vunpack.c.h.b16 %v733
        %v755 = vunpack.c.l.b16 %v734
        %v756 = vunpack.c.h.b16 %v734
        %v757 = vunpack.c.l.b16 %v735
        %v758 = vunpack.c.h.b16 %v735
        %v759 = vunpack.c.l.b16 %v736
        %v760 = vunpack.c.h.b16 %v736
        %v761 = vpack.c.b16 %v745, %v745
        %v762 = vpack.c.b16 %v746, %v746
        %v763 = vpack.c.b16 %v747, %v747
        %v764 = vpack.c.b16 %v748, %v748
        %v765 = vpack.c.b16 %v749, %v749
        %v766 = vpack.c.b16 %v750, %v750
        %v767 = vpack.c.b16 %v751, %v751
        %v768 = vpack.c.b16 %v752, %v752
        %v769 = vpack.c.b16 %v753, %v753
        %v770 = vpack.c.b16 %v754, %v754
        %v771 = vpack.c.b16 %v755, %v755
        %v772 = vpack.c.b16 %v756, %v756
        %v773 = vpack.c.b16 %v757, %v757
        %v774 = vpack.c.b16 %v758, %v758
        %v775 = vpack.c.b16 %v759, %v759
        %v776 = vpack.c.b16 %v760, %v760
        %793 = vst [vmem:[%s277] sm:$0xf] %v761
        %794 = vst [vmem:[%s277 + $0x4] sm:$0xf] %v762
        %795 = vst [vmem:[%s277 + $0x8] sm:$0xf] %v763
        %796 = vst [vmem:[%s277 + $0xc] sm:$0xf] %v764
        %797 = vst [vmem:[%s277 + $0x10] sm:$0xf] %v765
        %798 = vst [vmem:[%s277 + $0x14] sm:$0xf] %v766
        %799 = vst [vmem:[%s277 + $0x18] sm:$0xf] %v767
        %800 = vst [vmem:[%s277 + $0x1c] sm:$0xf] %v768
        %801 = vst [vmem:[%s277 + $0x20] sm:$0xf] %v769
        %802 = vst [vmem:[%s277 + $0x24] sm:$0xf] %v770
        %803 = vst [vmem:[%s277 + $0x28] sm:$0xf] %v771
        %804 = vst [vmem:[%s277 + $0x2c] sm:$0xf] %v772
        %805 = vst [vmem:[%s277 + $0x30] sm:$0xf] %v773
        %806 = vst [vmem:[%s277 + $0x34] sm:$0xf] %v774
        %807 = vst [vmem:[%s277 + $0x38] sm:$0xf] %v775
        %808 = vst [vmem:[%s277 + $0x3c] sm:$0xf] %v776
        %s809 = sand.u32 %s141, 1
        %s810 = scalar_lea.sflag [#allocation4], %s809
        %s811 = sand.u32 %s141, 1
        %s812 = smul.addr %s811, 64
        %s813 = scalar_lea.vmem [#allocation8], %s812
        // Predicated region
        $region53: #{tpu_custom_call.1} parent=39 // pred_check
          %p814 = pneg %p151
        $region54: #{tpu_custom_call.1} parent=39 // pred_check_branch
          %816 = sbr.rel (%p814) target = $region56
        $region55: #{tpu_custom_call.1} parent=39 // pred_region
          %s817 = smul.u32 16, %s23
          %s818 = ssub.s32 18, %s817
          %p819 = scmp.lt.s32.totalorder %s818, 16
          %s820 = scalar_select %p819, %s818, 16
          %s821 = smul.u32 64, %s820
          %s823 = ssub.s32 1024, %s821
          %824 = vsyncadd %s810, %s823
          %p825 = scmp.ne.s32.totalorder 0, %s821
          %s826 = smul.addr %s817, 64
          %s827 = scalar_lea.hbm %s5, %s826
          %s828 = smul.u32 4, %s820
          %s829 = sshll.u32 %s813, 4
          %s830 = int_to_ptr.vmem [resolvable:$true] %s829
          %s831 = sshll.u32 %s828, 4
          %835 = dma.vmem_to_hbm [thread:$0]  (%p825), %s830, %s831, %s827, %s810, 64, 64, 4
        $region56: #{tpu_custom_call.1} parent=39 // pred_fallthru
          _
      $region40: #{tpu_custom_call.1} parent=5 // pred_fallthru
        _
      %p836 = scmp.le.s32.totalorder 2, %s18
      // Predicated region
      $region57: #{tpu_custom_call.1} parent=5 // pred_check
        %p837 = pneg %p836
      $region58: #{tpu_custom_call.1} parent=5 // pred_check_branch
        %839 = sbr.rel (%p837) target = $region60
      $region59: #{tpu_custom_call.1} parent=5 // pred_region
        %s840 = ssub.s32 %s18, 2
        // Predicated region
        $region61: #{tpu_custom_call.1} parent=59 // pred_check
          %p841 = pneg %p157
        $region62: #{tpu_custom_call.1} parent=59 // pred_check_branch
          %843 = sbr.rel (%p841) target = $region64
        $region63: #{tpu_custom_call.1} parent=59 // pred_region
          %s844 = sand.u32 %s142, 1
          %s845 = scalar_lea.sflag [#allocation4], %s844
          %s846 = sand.u32 %s142, 1
          %s847 = smul.addr %s846, 64
          %s848 = scalar_lea.vmem [#allocation8], %s847
          %849 = dma.done %s845, 1024
        $region64: #{tpu_custom_call.1} parent=59 // pred_fallthru
          _
      $region60: #{tpu_custom_call.1} parent=5 // pred_fallthru
        _
    $region6: #{tpu_custom_call.1} parent=1 // loop_footer
      %s22 = sadd.s32 1, %s18
    $region7: #{tpu_custom_call.1} parent=1 // loop_footer_branch
      %17 = sbr.rel target = $region3
    $region8: #{tpu_custom_call.1} parent=1 // loop_exit
      _
    %850 = vsyncpa [#allocation3], 1
    %s851 = scalar_lea.sflag [#allocation3], 1
    %852 = vsyncpa %s851, 1
    %853 = vsyncpa [#allocation6], 1
    %854 = vsyncpa [#allocation4], 1
    %s855 = scalar_lea.sflag [#allocation4], 1
    %856 = vsyncpa %s855, 1

</llo_original>
